<compile_context>
chip_gen: v7x
topology: tpu7x:2x2x1
jax: 0.10.0
libtpu: 0.0.40
codegen_flags: <defaults>
</compile_context>

<pallas_src>
import jax
import jax.numpy as jnp
from jax.experimental import pallas as pl
from jax.experimental.pallas import tpu as pltpu


def _round_up(x, m):
    return (x + m - 1) // m * m


def ffn_kernel(x_ref, w1_ref, b1_ref, w2_ref, b2_ref, o_ref):
    # x_ref:  (tm, D)       compute dtype (bf16)      w1_ref: (D, d_ff_p)
    # b1_ref: (1, d_ff_p)   f32                       w2_ref: (d_ff_p, D)
    # b2_ref: (1, D)        f32                       o_ref:  (tm, D) f32
    x = x_ref[...]
    # First linear: MXU matmul, f32 accumulation.
    h = jnp.dot(x, w1_ref[...], preferred_element_type=jnp.float32)
    # Bias + ReLU on the f32 accumulator (VPU), before any downcast.
    h = jnp.maximum(h + b1_ref[...], 0.0)
    # Dropout: identity (eval mode).
    # Second linear: deliberate cast of the activations to the matmul dtype,
    # f32 accumulation, f32 bias add, single downcast at the store.
    y = jnp.dot(h.astype(w2_ref.dtype), w2_ref[...],
                preferred_element_type=jnp.float32)
    o_ref[...] = (y + b2_ref[...]).astype(o_ref.dtype)


def positionwise_feed_forward(x, w1, b1, w2, b2, *, tm=256,
                              compute_dtype=jnp.bfloat16):
    """x: (batch, seq, d_model).  w1: (d_model, d_ff), w2: (d_ff, d_model).

    Returns (batch, seq, d_model) in x.dtype.
    """
    B, S, D = x.shape
    d_ff = w1.shape[1]
    M = B * S

    # ---- lane-dense hidden dimension: zero-pad d_ff up to a multiple of 128.
    d_ff_p = _round_up(d_ff, 128)
    if d_ff_p != d_ff:
        w1 = jnp.pad(w1, ((0, 0), (0, d_ff_p - d_ff)))
        b1 = jnp.pad(b1, ((0, d_ff_p - d_ff),))
        w2 = jnp.pad(w2, ((0, d_ff_p - d_ff), (0, 0)))

    # ---- row tile: large enough to feed the MXU, never (much) larger than M,
    # always a multiple of 8 (sublane granularity).
    tm = _round_up(max(8, min(tm, _round_up(M, 8))), 8)
    M_pad = _round_up(M, tm)

    x2d = x.reshape(M, D)
    if M_pad != M:
        x2d = jnp.pad(x2d, ((0, M_pad - M), (0, 0)))

    # bf16 matmul inputs (halves weight DMA + VMEM), f32 biases.
    x2d = x2d.astype(compute_dtype)
    w1c = w1.astype(compute_dtype)
    w2c = w2.astype(compute_dtype)
    b1r = b1.reshape(1, d_ff_p).astype(jnp.float32)
    b2r = b2.reshape(1, D).astype(jnp.float32)

    grid = (M_pad // tm,)

    # ---- VMEM budget: double-buffered x/out row tiles, single-copy resident
    # weights, f32 intermediate.  2x headroom, capped under v7x's 64 MiB VMEM.
    cbytes = jnp.dtype(compute_dtype).itemsize
    working = (2 * tm * D * cbytes                       # x tiles, 2-deep
               + 2 * tm * D * x.dtype.itemsize           # out tiles, 2-deep
               + (D * d_ff_p + d_ff_p * D) * cbytes      # weights (resident)
               + (d_ff_p + D) * 4                        # biases
               + tm * d_ff_p * 4)                        # f32 intermediate
    vmem_limit = int(min(max(2 * working, 32 * 1024 * 1024), 48 * 1024 * 1024))

    # Grid-invariant operands live in VMEM once (un-pipelined, not
    # double-buffered per grid step).
    resident = pl.BlockSpec(memory_space=pltpu.MemorySpace.VMEM)

    out2d = pl.pallas_call(
        ffn_kernel,
        out_shape=jax.ShapeDtypeStruct((M_pad, D), x.dtype),
        grid_spec=pltpu.PrefetchScalarGridSpec(
            num_scalar_prefetch=0,
            grid=grid,
            in_specs=[
                pl.BlockSpec((tm, D), lambda i: (i, 0)),   # x rows (pipelined)
                resident,                                  # w1 (D, d_ff_p)
                resident,                                  # b1 (1, d_ff_p)
                resident,                                  # w2 (d_ff_p, D)
                resident,                                  # b2 (1, D)
            ],
            out_specs=pl.BlockSpec((tm, D), lambda i: (i, 0)),
        ),
        compiler_params=pltpu.CompilerParams(
            dimension_semantics=("parallel",),
            vmem_limit_bytes=vmem_limit),
    )(x2d, w1c, b1r, w2c, b2r)

    return out2d[:M].reshape(B, S, D)


def _ffn_ref_matched(x, w1, b1, w2, b2, compute_dtype=jnp.bfloat16):
    """Pure-JAX reference using the same bf16-input / f32-accumulate math."""
    h = jnp.dot(x.astype(compute_dtype), w1.astype(compute_dtype),
                preferred_element_type=jnp.float32) + b1
    h = jnp.maximum(h, 0.0)
    y = jnp.dot(h.astype(compute_dtype), w2.astype(compute_dtype),
                preferred_element_type=jnp.float32) + b2
    return y.astype(x.dtype)


def _ffn_ref_f32(x, w1, b1, w2, b2):
    return jnp.maximum(x @ w1 + b1, 0.0) @ w2 + b2


if __name__ == "__main__":
    d_model = 512
    d_ff = 64

    key = jax.random.PRNGKey(0)
    kx, kw1, kb1, kw2, kb2, kx2 = jax.random.split(key, 6)

    # nn.Linear default init: U(-1/sqrt(fan_in), 1/sqrt(fan_in)).
    lim1 = 1.0 / (d_model ** 0.5)
    lim2 = 1.0 / (d_ff ** 0.5)
    # Stored pre-transposed: (in, out).
    w1 = jax.random.uniform(kw1, (d_model, d_ff), jnp.float32, -lim1, lim1)
    b1 = jax.random.uniform(kb1, (d_ff,), jnp.float32, -lim1, lim1)
    w2 = jax.random.uniform(kw2, (d_ff, d_model), jnp.float32, -lim2, lim2)
    b2 = jax.random.uniform(kb2, (d_model,), jnp.float32, -lim2, lim2)

    # --- primary small test (matches the module's toy shapes: batch=2, seq=8)
    batch, seq = 2, 8
    x = jax.random.normal(kx, (batch, seq, d_model), dtype=jnp.float32)
    out = positionwise_feed_forward(x, w1, b1, w2, b2)
    out = jax.block_until_ready(out)

    ref_m = _ffn_ref_matched(x, w1, b1, w2, b2)
    ref_f = _ffn_ref_f32(x, w1, b1, w2, b2)
    assert out.shape == (batch, seq, d_model)
    assert jnp.allclose(out, ref_m, atol=2e-3, rtol=2e-3), "mismatch vs matched ref"
    assert float(jnp.max(jnp.abs(out - ref_f))) < 5e-2, "mismatch vs f32 ref"

    # --- second test: rows not divisible by the tile (exercises padding path
    # and a multi-step grid with the 256-row tile).
    batch2, seq2 = 2, 300
    x2 = jax.random.normal(kx2, (batch2, seq2, d_model), dtype=jnp.float32)
    out2 = positionwise_feed_forward(x2, w1, b1, w2, b2)
    out2 = jax.block_until_ready(out2)

    ref2_m = _ffn_ref_matched(x2, w1, b1, w2, b2)
    ref2_f = _ffn_ref_f32(x2, w1, b1, w2, b2)
    assert out2.shape == (batch2, seq2, d_model)
    assert jnp.allclose(out2, ref2_m, atol=2e-3, rtol=2e-3), "mismatch vs matched ref (padded)"
    assert float(jnp.max(jnp.abs(out2 - ref2_f))) < 5e-2, "mismatch vs f32 ref (padded)"

    print("KERNEL_OK")
</pallas_src>

<mosaic_0001>
module attributes {stable_mosaic.version = 11 : i64} {
  func.func @ffn_kernel(%arg0: i32, %arg1: memref<16x512xbf16, #tpu.memory_space<vmem>>, %arg2: memref<512x128xbf16, #tpu.memory_space<vmem>>, %arg3: memref<1x128xf32, #tpu.memory_space<vmem>>, %arg4: memref<128x512xbf16, #tpu.memory_space<vmem>>, %arg5: memref<1x512xf32, #tpu.memory_space<vmem>>, %arg6: memref<16x512xf32, #tpu.memory_space<vmem>>) attributes {dimension_semantics = [#tpu.dimension_semantics<parallel>], iteration_bounds = array<i64: 1>, scalar_prefetch = 0 : i64, scratch_operands = 0 : i64, tpu.core_type = #tpu.core_type<tc>, window_params = [{transform_indices = @transform_0, window_bounds = array<i64: 16, 512>}, {pipeline_mode = #tpu.pipeline_mode<synchronous>, transform_indices = @transform_1, window_bounds = array<i64: 512, 128>}, {pipeline_mode = #tpu.pipeline_mode<synchronous>, transform_indices = @transform_2, window_bounds = array<i64: 1, 128>}, {pipeline_mode = #tpu.pipeline_mode<synchronous>, transform_indices = @transform_3, window_bounds = array<i64: 128, 512>}, {pipeline_mode = #tpu.pipeline_mode<synchronous>, transform_indices = @transform_4, window_bounds = array<i64: 1, 512>}, {transform_indices = @transform_5, window_bounds = array<i64: 16, 512>}]} {
    %c0 = arith.constant 0 : index
    %c0_0 = arith.constant 0 : index
    %0 = vector.load %arg1[%c0, %c0_0] : memref<16x512xbf16, #tpu.memory_space<vmem>>, vector<16x512xbf16>
    %c0_1 = arith.constant 0 : index
    %c0_2 = arith.constant 0 : index
    %1 = vector.load %arg2[%c0_1, %c0_2] : memref<512x128xbf16, #tpu.memory_space<vmem>>, vector<512x128xbf16>
    %cst = arith.constant dense<0.000000e+00> : vector<16x128xf32>
    %2 = tpu.matmul %0, %1, %cst {dimension_numbers = #tpu.dot_dimension_numbers<[1], [0], [0], [1], [0, 0, 1, 1], [], []>} : vector<16x512xbf16>, vector<512x128xbf16>, vector<16x128xf32> -> vector<16x128xf32>
    %c0_3 = arith.constant 0 : index
    %c0_4 = arith.constant 0 : index
    %3 = vector.load %arg3[%c0_3, %c0_4] : memref<1x128xf32, #tpu.memory_space<vmem>>, vector<1x128xf32>
    %4 = vector.broadcast %3 : vector<1x128xf32> to vector<16x128xf32>
    %5 = arith.addf %2, %4 : vector<16x128xf32>
    %cst_5 = arith.constant 0.000000e+00 : f32
    %6 = vector.broadcast %cst_5 : f32 to vector<16x128xf32>
    %7 = arith.maximumf %5, %6 : vector<16x128xf32>
    %8 = arith.truncf %7 : vector<16x128xf32> to vector<16x128xbf16>
    %c0_6 = arith.constant 0 : index
    %c0_7 = arith.constant 0 : index
    %9 = vector.load %arg4[%c0_6, %c0_7] : memref<128x512xbf16, #tpu.memory_space<vmem>>, vector<128x512xbf16>
    %cst_8 = arith.constant dense<0.000000e+00> : vector<16x512xf32>
    %10 = tpu.matmul %8, %9, %cst_8 {dimension_numbers = #tpu.dot_dimension_numbers<[1], [0], [0], [1], [0, 0, 1, 1], [], []>} : vector<16x128xbf16>, vector<128x512xbf16>, vector<16x512xf32> -> vector<16x512xf32>
    %c0_9 = arith.constant 0 : index
    %c0_10 = arith.constant 0 : index
    %11 = vector.load %arg5[%c0_9, %c0_10] : memref<1x512xf32, #tpu.memory_space<vmem>>, vector<1x512xf32>
    %12 = vector.broadcast %11 : vector<1x512xf32> to vector<16x512xf32>
    %13 = arith.addf %10, %12 : vector<16x512xf32>
    %c0_11 = arith.constant 0 : index
    %c0_12 = arith.constant 0 : index
    %14 = vector.load %arg6[%c0_11, %c0_12] : memref<16x512xf32, #tpu.memory_space<vmem>>, vector<16x512xf32>
    tpu.vector_store %arg6[%c0_11, %c0_12], %13 {strides = array<i32>} : memref<16x512xf32, #tpu.memory_space<vmem>>, vector<16x512xf32>,
    return
  }
  func.func @transform_0(%arg0: i32) -> (i32, i32) {
    %c0_i32 = arith.constant 0 : i32
    %c0_i32_0 = arith.constant 0 : i32
    return %arg0, %c0_i32 : i32, i32
  }
  func.func @transform_1(%arg0: i32) -> (i32, i32) {
    %c0_i32 = arith.constant 0 : i32
    %c0_i32_0 = arith.constant 0 : i32
    %c0_i32_1 = arith.constant 0 : i32
    return %c0_i32, %c0_i32_0 : i32, i32
  }
  func.func @transform_2(%arg0: i32) -> (i32, i32) {
    %c0_i32 = arith.constant 0 : i32
    %c0_i32_0 = arith.constant 0 : i32
    %c0_i32_1 = arith.constant 0 : i32
    return %c0_i32, %c0_i32_0 : i32, i32
  }
  func.func @transform_3(%arg0: i32) -> (i32, i32) {
    %c0_i32 = arith.constant 0 : i32
    %c0_i32_0 = arith.constant 0 : i32
    %c0_i32_1 = arith.constant 0 : i32
    return %c0_i32, %c0_i32_0 : i32, i32
  }
  func.func @transform_4(%arg0: i32) -> (i32, i32) {
    %c0_i32 = arith.constant 0 : i32
    %c0_i32_0 = arith.constant 0 : i32
    %c0_i32_1 = arith.constant 0 : i32
    return %c0_i32, %c0_i32_0 : i32, i32
  }
  func.func @transform_5(%arg0: i32) -> (i32, i32) {
    %c0_i32 = arith.constant 0 : i32
    %c0_i32_0 = arith.constant 0 : i32
    return %arg0, %c0_i32 : i32, i32
  }
}

</mosaic_0001>

<llo_original>
// kernel: tpu_custom_call.1
$region0: #{tpu_custom_call.1}
  #allocation0 [shape = 'u32[]', space=smem, size = 0x4, offset = 0x4, fixed_abs, tag = 'smem constant byte address 0x4 - core index']
  #allocation1 [shape = 'u32[144,128]{1,0:T(1,128)}', space=vmem, size = 0x12000, scoped, tag = 'internal scratch']
  %s0 = inlined_call_operand.hbm [shape: bf16[16,512], index: 0, kind: input, shape index: {}]
  %s1 = inlined_call_operand.hbm [shape: bf16[512,128], index: 1, kind: input, shape index: {}]
  %s2 = inlined_call_operand.vmem [shape: f32[1,128], index: 2, kind: input, shape index: {}]
  %s3 = inlined_call_operand.hbm [shape: bf16[128,512], index: 3, kind: input, shape index: {}]
  %s4 = inlined_call_operand.vmem [shape: f32[1,512], index: 4, kind: input, shape index: {}]
  %s5 = inlined_call_operand.hbm [shape: f32[16,512], index: 5, kind: output, shape index: {}]
  %s6 = sld [smem:[#allocation0]]
  $region42: #{tpu_custom_call.1} parent=0
    _
  %s8 = ssub.s32 1, %s6
  %s9 = scalar_select 0, %s8, %s6
  $region1: #{tpu_custom_call.1} parent=0
    #allocation2 [shape = 'u8[16384]{0}', space=vmem, size = 0x4000, scoped, tag = 'input window, operand 0, single buffered']
    #allocation3 [shape = 's32[1]{0}', space=sflag, size = 0x4, scoped, tag = 'scoped memory for tpu_custom_call.1']
    #allocation4 [shape = 's32[1]{0}', space=sflag, size = 0x4, scoped, tag = 'scoped memory for tpu_custom_call.1']
    #allocation5 [shape = 'u8[131072]{0}', space=vmem, size = 0x20000, scoped, tag = 'input window, operand 1, single buffered']
    #allocation6 [shape = 's32[1]{0}', space=sflag, size = 0x4, scoped, tag = 'scoped memory for tpu_custom_call.1']
    #allocation7 [shape = 'u8[131072]{0}', space=vmem, size = 0x20000, scoped, tag = 'input window, operand 3, single buffered']
    #allocation8 [shape = 'u8[32768]{0}', space=vmem, size = 0x8000, scoped, tag = 'output window, operand 0, single buffered']
    %10 = vsyncpa [#allocation3], 0
    %11 = vsyncpa [#allocation6], 0
    %12 = vsyncpa [#allocation4], 0
    // Predicated region
    $region2: #{tpu_custom_call.1} parent=1 // pred_check
      _
    $region3: #{tpu_custom_call.1} parent=1 // pred_check_branch
      %14 = sbr.rel (0) target = $region5
    $region4: #{tpu_custom_call.1} parent=1 // pred_region
      %s16 = ssub.s32 512, 512
      %17 = vsyncadd [#allocation3], %s16
      %s18 = sshll.u32 [#allocation2], 4
      %s19 = int_to_ptr.vmem [resolvable:$true] %s18
      %24 = dma.hbm_to_vmem [thread:$0]  %s0, 512, %s19, [#allocation3], 256, 256, 16
    $region5: #{tpu_custom_call.1} parent=1 // pred_fallthru
      _
    // Predicated region
    $region6: #{tpu_custom_call.1} parent=1 // pred_check
      _
    $region7: #{tpu_custom_call.1} parent=1 // pred_check_branch
      %26 = sbr.rel (0) target = $region9
    $region8: #{tpu_custom_call.1} parent=1 // pred_region
      %s28 = ssub.s32 4096, 4096
      %29 = vsyncadd [#allocation6], %s28
      %s30 = sshll.u32 [#allocation5], 4
      %s31 = int_to_ptr.vmem [resolvable:$true] %s30
      %36 = dma.hbm_to_vmem [thread:$0]  %s1, 4096, %s31, [#allocation6], 64, 64, 4
    $region9: #{tpu_custom_call.1} parent=1 // pred_fallthru
      _
    // Predicated region
    $region10: #{tpu_custom_call.1} parent=1 // pred_check
      _
    $region11: #{tpu_custom_call.1} parent=1 // pred_check_branch
      %38 = sbr.rel (0) target = $region13
    $region12: #{tpu_custom_call.1} parent=1 // pred_region
      _
    $region13: #{tpu_custom_call.1} parent=1 // pred_fallthru
      _
    // Predicated region
    $region14: #{tpu_custom_call.1} parent=1 // pred_check
      _
    $region15: #{tpu_custom_call.1} parent=1 // pred_check_branch
      %40 = sbr.rel (0) target = $region17
    $region16: #{tpu_custom_call.1} parent=1 // pred_region
      %s42 = ssub.s32 4096, 4096
      %43 = vsyncadd [#allocation6], %s42
      %s44 = sshll.u32 [#allocation7], 4
      %s45 = int_to_ptr.vmem [resolvable:$true] %s44
      %50 = dma.hbm_to_vmem [thread:$0]  %s3, 4096, %s45, [#allocation6], 256, 256, 16
    $region17: #{tpu_custom_call.1} parent=1 // pred_fallthru
      _
    // Predicated region
    $region18: #{tpu_custom_call.1} parent=1 // pred_check
      _
    $region19: #{tpu_custom_call.1} parent=1 // pred_check_branch
      %52 = sbr.rel (0) target = $region21
    $region20: #{tpu_custom_call.1} parent=1 // pred_region
      _
    $region21: #{tpu_custom_call.1} parent=1 // pred_fallthru
      _
    // Predicated region
    $region22: #{tpu_custom_call.1} parent=1 // pred_check
      _
    $region23: #{tpu_custom_call.1} parent=1 // pred_check_branch
      %54 = sbr.rel (0) target = $region25
    $region24: #{tpu_custom_call.1} parent=1 // pred_region
      %55 = dma.done [#allocation3], 512
    $region25: #{tpu_custom_call.1} parent=1 // pred_fallthru
      _
    // Predicated region
    $region26: #{tpu_custom_call.1} parent=1 // pred_check
      _
    $region27: #{tpu_custom_call.1} parent=1 // pred_check_branch
      %57 = sbr.rel (0) target = $region29
    $region28: #{tpu_custom_call.1} parent=1 // pred_region
      %58 = dma.done [#allocation6], 4096
    $region29: #{tpu_custom_call.1} parent=1 // pred_fallthru
      _
    // Predicated region
    $region30: #{tpu_custom_call.1} parent=1 // pred_check
      _
    $region31: #{tpu_custom_call.1} parent=1 // pred_check_branch
      %60 = sbr.rel (0) target = $region33
    $region32: #{tpu_custom_call.1} parent=1 // pred_region
      %61 = dma.done [#allocation6], 4096
    $region33: #{tpu_custom_call.1} parent=1 // pred_fallthru
      _
    %v63 = vld [vmem:[#allocation2] sm:$0xff]
    %v64 = vld [vmem:[#allocation2 + $0x8] sm:$0xff]
    %v65 = vld [vmem:[#allocation2 + $0x10] sm:$0xff]
    %v66 = vld [vmem:[#allocation2 + $0x18] sm:$0xff]
    %v67 = vld [vmem:[#allocation5] sm:$0xf]
    %v68 = vld [vmem:[#allocation5 + $0x4] sm:$0xf]
    %v69 = vld [vmem:[#allocation5 + $0x8] sm:$0xf]
    %v70 = vld [vmem:[#allocation5 + $0xc] sm:$0xf]
    %v71 = vld [vmem:[#allocation5 + $0x10] sm:$0xf]
    %v72 = vld [vmem:[#allocation5 + $0x14] sm:$0xf]
    %v73 = vld [vmem:[#allocation5 + $0x18] sm:$0xf]
    %v74 = vld [vmem:[#allocation5 + $0x1c] sm:$0xf]
    %v75 = vld [vmem:[#allocation5 + $0x20] sm:$0xf]
    %v76 = vld [vmem:[#allocation5 + $0x24] sm:$0xf]
    %v77 = vld [vmem:[#allocation5 + $0x28] sm:$0xf]
    %v78 = vld [vmem:[#allocation5 + $0x2c] sm:$0xf]
    %v79 = vld [vmem:[#allocation5 + $0x30] sm:$0xf]
    %v80 = vld [vmem:[#allocation5 + $0x34] sm:$0xf]
    %v81 = vld [vmem:[#allocation5 + $0x38] sm:$0xf]
    %v82 = vld [vmem:[#allocation5 + $0x3c] sm:$0xf]
    %v83 = vld [vmem:[#allocation5 + $0x40] sm:$0xf]
    %v84 = vld [vmem:[#allocation5 + $0x44] sm:$0xf]
    %v85 = vld [vmem:[#allocation5 + $0x48] sm:$0xf]
    %v86 = vld [vmem:[#allocation5 + $0x4c] sm:$0xf]
    %v87 = vld [vmem:[#allocation5 + $0x50] sm:$0xf]
    %v88 = vld [vmem:[#allocation5 + $0x54] sm:$0xf]
    %v89 = vld [vmem:[#allocation5 + $0x58] sm:$0xf]
    %v90 = vld [vmem:[#allocation5 + $0x5c] sm:$0xf]
    %v91 = vld [vmem:[#allocation5 + $0x60] sm:$0xf]
    %v92 = vld [vmem:[#allocation5 + $0x64] sm:$0xf]
    %v93 = vld [vmem:[#allocation5 + $0x68] sm:$0xf]
    %v94 = vld [vmem:[#allocation5 + $0x6c] sm:$0xf]
    %v95 = vld [vmem:[#allocation5 + $0x70] sm:$0xf]
    %v96 = vld [vmem:[#allocation5 + $0x74] sm:$0xf]
    %v97 = vld [vmem:[#allocation5 + $0x78] sm:$0xf]
    %v98 = vld [vmem:[#allocation5 + $0x7c] sm:$0xf]
    %v99 = vld [vmem:[#allocation5 + $0x80] sm:$0xf]
    %v100 = vld [vmem:[#allocation5 + $0x84] sm:$0xf]
    %v101 = vld [vmem:[#allocation5 + $0x88] sm:$0xf]
    %v102 = vld [vmem:[#allocation5 + $0x8c] sm:$0xf]
    %v103 = vld [vmem:[#allocation5 + $0x90] sm:$0xf]
    %v104 = vld [vmem:[#allocation5 + $0x94] sm:$0xf]
    %v105 = vld [vmem:[#allocation5 + $0x98] sm:$0xf]
    %v106 = vld [vmem:[#allocation5 + $0x9c] sm:$0xf]
    %v107 = vld [vmem:[#allocation5 + $0xa0] sm:$0xf]
    %v108 = vld [vmem:[#allocation5 + $0xa4] sm:$0xf]
    %v109 = vld [vmem:[#allocation5 + $0xa8] sm:$0xf]
    %v110 = vld [vmem:[#allocation5 + $0xac] sm:$0xf]
    %v111 = vld [vmem:[#allocation5 + $0xb0] sm:$0xf]
    %v112 = vld [vmem:[#allocation5 + $0xb4] sm:$0xf]
    %v113 = vld [vmem:[#allocation5 + $0xb8] sm:$0xf]
    %v114 = vld [vmem:[#allocation5 + $0xbc] sm:$0xf]
    %v115 = vld [vmem:[#allocation5 + $0xc0] sm:$0xf]
    %v116 = vld [vmem:[#allocation5 + $0xc4] sm:$0xf]
    %v117 = vld [vmem:[#allocation5 + $0xc8] sm:$0xf]
    %v118 = vld [vmem:[#allocation5 + $0xcc] sm:$0xf]
    %v119 = vld [vmem:[#allocation5 + $0xd0] sm:$0xf]
    %v120 = vld [vmem:[#allocation5 + $0xd4] sm:$0xf]
    %v121 = vld [vmem:[#allocation5 + $0xd8] sm:$0xf]
    %v122 = vld [vmem:[#allocation5 + $0xdc] sm:$0xf]
    %v123 = vld [vmem:[#allocation5 + $0xe0] sm:$0xf]
    %v124 = vld [vmem:[#allocation5 + $0xe4] sm:$0xf]
    %v125 = vld [vmem:[#allocation5 + $0xe8] sm:$0xf]
    %v126 = vld [vmem:[#allocation5 + $0xec] sm:$0xf]
    %v127 = vld [vmem:[#allocation5 + $0xf0] sm:$0xf]
    %v128 = vld [vmem:[#allocation5 + $0xf4] sm:$0xf]
    %v129 = vld [vmem:[#allocation5 + $0xf8] sm:$0xf]
    %v130 = vld [vmem:[#allocation5 + $0xfc] sm:$0xf]
    %v131 = vld [vmem:[%s2] sm:$0x1]
    %v133 = vlaneseq
    %v134 = vshrl.u32 %v133, 7
    %v135 = vsub.s32 0, %v134
    %v136 = vrot.slane %v131, %v135
    %v142 = vunpack.c.l.b16 %v63
    %v143 = vunpack.c.h.b16 %v63
    %v144 = vunpack.c.l.b16 %v64
    %v145 = vunpack.c.h.b16 %v64
    %v146 = vunpack.c.l.b16 %v65
    %v147 = vunpack.c.h.b16 %v65
    %v148 = vunpack.c.l.b16 %v66
    %v149 = vunpack.c.h.b16 %v66
    %v150 = vpack.c.b16 %v146, %v142
    %v151 = vpack.c.b16 %v147, %v143
    %v152 = vpack.c.b16 %v148, %v144
    %v153 = vpack.c.b16 %v149, %v145
    %v222 = vunpack.c.l.b16 %v67
    %v223 = vunpack.c.l.b16 %v68
    %v224 = vunpack.c.l.b16 %v69
    %v225 = vunpack.c.l.b16 %v70
    %v226 = vunpack.c.l.b16 %v71
    %v227 = vunpack.c.l.b16 %v72
    %v228 = vunpack.c.l.b16 %v73
    %v229 = vunpack.c.l.b16 %v74
    %v230 = vunpack.c.l.b16 %v75
    %v231 = vunpack.c.l.b16 %v76
    %v232 = vunpack.c.l.b16 %v77
    %v233 = vunpack.c.l.b16 %v78
    %v234 = vunpack.c.l.b16 %v79
    %v235 = vunpack.c.l.b16 %v80
    %v236 = vunpack.c.l.b16 %v81
    %v237 = vunpack.c.l.b16 %v82
    %v238 = vunpack.c.l.b16 %v83
    %v239 = vunpack.c.l.b16 %v84
    %v240 = vunpack.c.l.b16 %v85
    %v241 = vunpack.c.l.b16 %v86
    %v242 = vunpack.c.l.b16 %v87
    %v243 = vunpack.c.l.b16 %v88
    %v244 = vunpack.c.l.b16 %v89
    %v245 = vunpack.c.l.b16 %v90
    %v246 = vunpack.c.l.b16 %v91
    %v247 = vunpack.c.l.b16 %v92
    %v248 = vunpack.c.l.b16 %v93
    %v249 = vunpack.c.l.b16 %v94
    %v250 = vunpack.c.l.b16 %v95
    %v251 = vunpack.c.l.b16 %v96
    %v252 = vunpack.c.l.b16 %v97
    %v253 = vunpack.c.l.b16 %v98
    %v254 = vunpack.c.l.b16 %v99
    %v255 = vunpack.c.l.b16 %v100
    %v256 = vunpack.c.l.b16 %v101
    %v257 = vunpack.c.l.b16 %v102
    %v258 = vunpack.c.l.b16 %v103
    %v259 = vunpack.c.l.b16 %v104
    %v260 = vunpack.c.l.b16 %v105
    %v261 = vunpack.c.l.b16 %v106
    %v262 = vunpack.c.l.b16 %v107
    %v263 = vunpack.c.l.b16 %v108
    %v264 = vunpack.c.l.b16 %v109
    %v265 = vunpack.c.l.b16 %v110
    %v266 = vunpack.c.l.b16 %v111
    %v267 = vunpack.c.l.b16 %v112
    %v268 = vunpack.c.l.b16 %v113
    %v269 = vunpack.c.l.b16 %v114
    %v270 = vunpack.c.l.b16 %v115
    %v271 = vunpack.c.l.b16 %v116
    %v272 = vunpack.c.l.b16 %v117
    %v273 = vunpack.c.l.b16 %v118
    %v274 = vunpack.c.l.b16 %v119
    %v275 = vunpack.c.l.b16 %v120
    %v276 = vunpack.c.l.b16 %v121
    %v277 = vunpack.c.l.b16 %v122
    %v278 = vunpack.c.l.b16 %v123
    %v279 = vunpack.c.l.b16 %v124
    %v280 = vunpack.c.l.b16 %v125
    %v281 = vunpack.c.l.b16 %v126
    %v282 = vunpack.c.l.b16 %v127
    %v283 = vunpack.c.l.b16 %v128
    %v284 = vunpack.c.l.b16 %v129
    %v285 = vunpack.c.l.b16 %v130
    %v286 = vpack.c.b16 %v223, %v222
    %v287 = vpack.c.b16 %v225, %v224
    %v288 = vpack.c.b16 %v227, %v226
    %v289 = vpack.c.b16 %v229, %v228
    %v290 = vpack.c.b16 %v231, %v230
    %v291 = vpack.c.b16 %v233, %v232
    %v292 = vpack.c.b16 %v235, %v234
    %v293 = vpack.c.b16 %v237, %v236
    %v294 = vpack.c.b16 %v239, %v238
    %v295 = vpack.c.b16 %v241, %v240
    %v296 = vpack.c.b16 %v243, %v242
    %v297 = vpack.c.b16 %v245, %v244
    %v298 = vpack.c.b16 %v247, %v246
    %v299 = vpack.c.b16 %v249, %v248
    %v300 = vpack.c.b16 %v251, %v250
    %v301 = vpack.c.b16 %v253, %v252
    %v302 = vpack.c.b16 %v255, %v254
    %v303 = vpack.c.b16 %v257, %v256
    %v304 = vpack.c.b16 %v259, %v258
    %v305 = vpack.c.b16 %v261, %v260
    %v306 = vpack.c.b16 %v263, %v262
    %v307 = vpack.c.b16 %v265, %v264
    %v308 = vpack.c.b16 %v267, %v266
    %v309 = vpack.c.b16 %v269, %v268
    %v310 = vpack.c.b16 %v271, %v270
    %v311 = vpack.c.b16 %v273, %v272
    %v312 = vpack.c.b16 %v275, %v274
    %v313 = vpack.c.b16 %v277, %v276
    %v314 = vpack.c.b16 %v279, %v278
    %v315 = vpack.c.b16 %v281, %v280
    %v316 = vpack.c.b16 %v283, %v282
    %v317 = vpack.c.b16 %v285, %v284
    %350 = vmatprep.subr.bf16.mxu0 0
    %351 = vmatpush1.bf16.msra.mxu0 %v286
    %352 = vmatprep.subr.bf16.mxu0 0
    %353 = vmatpush1.bf16.msra.mxu0 %v287
    %354 = vmatprep.subr.bf16.mxu0 0
    %355 = vmatpush1.bf16.msra.mxu0 %v288
    %356 = vmatprep.subr.bf16.mxu0 0
    %357 = vmatpush1.bf16.msra.mxu0 %v289
    %358 = vmatprep.subr.bf16.mxu0 0
    %359 = vmatpush1.bf16.msra.mxu0 %v290
    %360 = vmatprep.subr.bf16.mxu0 0
    %361 = vmatpush1.bf16.msra.mxu0 %v291
    %362 = vmatprep.subr.bf16.mxu0 0
    %363 = vmatpush1.bf16.msra.mxu0 %v292
    %364 = vmatprep.subr.bf16.mxu0 0
    %365 = vmatpush1.bf16.msra.mxu0 %v293
    %366 = vmatprep.subr.bf16.mxu0 0
    %367 = vmatpush1.bf16.msra.mxu0 %v294
    %368 = vmatprep.subr.bf16.mxu0 0
    %369 = vmatpush1.bf16.msra.mxu0 %v295
    %370 = vmatprep.subr.bf16.mxu0 0
    %371 = vmatpush1.bf16.msra.mxu0 %v296
    %372 = vmatprep.subr.bf16.mxu0 0
    %373 = vmatpush1.bf16.msra.mxu0 %v297
    %374 = vmatprep.subr.bf16.mxu0 0
    %375 = vmatpush1.bf16.msra.mxu0 %v298
    %376 = vmatprep.subr.bf16.mxu0 0
    %377 = vmatpush1.bf16.msra.mxu0 %v299
    %378 = vmatprep.subr.bf16.mxu0 0
    %379 = vmatpush1.bf16.msra.mxu0 %v300
    %380 = vmatprep.subr.bf16.mxu0 0
    %381 = vmatpush1.bf16.msra.mxu0 %v301
    %382 = vmatprep.mubr.bf16.mxu0 %v151
    %383 = vmatmul.mubr.bf16.gmra.mrb[0].mxu0 %v150
    %v384 = vpop.f32.mrb[0].mxu0
    %v385 = vadd.f32 %v136, %v384
    %v386 = vpop.f32.mrb[0].mxu0
    %v387 = vpop.f32.mrb[0].mxu0
    %v388 = vadd.f32 %v136, %v387
    %v389 = vpop.f32.mrb[0].mxu0
    %390 = vdwg.mxu0
    %391 = vmatprep.subr.bf16.mxu0 0
    %392 = vmatpush1.bf16.msra.mxu0 %v302
    %393 = vmatprep.subr.bf16.mxu0 0
    %394 = vmatpush1.bf16.msra.mxu0 %v303
    %395 = vmatprep.subr.bf16.mxu0 0
    %396 = vmatpush1.bf16.msra.mxu0 %v304
    %397 = vmatprep.subr.bf16.mxu0 0
    %398 = vmatpush1.bf16.msra.mxu0 %v305
    %399 = vmatprep.subr.bf16.mxu0 0
    %400 = vmatpush1.bf16.msra.mxu0 %v306
    %401 = vmatprep.subr.bf16.mxu0 0
    %402 = vmatpush1.bf16.msra.mxu0 %v307
    %403 = vmatprep.subr.bf16.mxu0 0
    %404 = vmatpush1.bf16.msra.mxu0 %v308
    %405 = vmatprep.subr.bf16.mxu0 0
    %406 = vmatpush1.bf16.msra.mxu0 %v309
    %407 = vmatprep.subr.bf16.mxu0 0
    %408 = vmatpush1.bf16.msra.mxu0 %v310
    %409 = vmatprep.subr.bf16.mxu0 0
    %410 = vmatpush1.bf16.msra.mxu0 %v311
    %411 = vmatprep.subr.bf16.mxu0 0
    %412 = vmatpush1.bf16.msra.mxu0 %v312
    %413 = vmatprep.subr.bf16.mxu0 0
    %414 = vmatpush1.bf16.msra.mxu0 %v313
    %415 = vmatprep.subr.bf16.mxu0 0
    %416 = vmatpush1.bf16.msra.mxu0 %v314
    %417 = vmatprep.subr.bf16.mxu0 0
    %418 = vmatpush1.bf16.msra.mxu0 %v315
    %419 = vmatprep.subr.bf16.mxu0 0
    %420 = vmatpush1.bf16.msra.mxu0 %v316
    %421 = vmatprep.subr.bf16.mxu0 0
    %422 = vmatpush1.bf16.msra.mxu0 %v317
    %423 = vmatprep.mubr.bf16.mxu0 %v153
    %424 = vmatmul.mubr.bf16.gmra.mrb[0].mxu0 %v152
    %v425 = vpop.f32.mrb[0].mxu0
    %v426 = vadd.f32 %v385, %v425
    %v427 = vpop.f32.mrb[0].mxu0
    %v428 = vpop.f32.mrb[0].mxu0
    %v429 = vadd.f32 %v388, %v428
    %v430 = vpop.f32.mrb[0].mxu0
    %431 = vdwg.mxu0
    %v432 = vmax.f32 %v426, 0.0
    %v433 = vmax.f32 %v429, 0.0
    %v434 = vpack.c.bf16 %v433, %v432
    %v435 = vld [vmem:[#allocation7] sm:$0xff]
    %v436 = vld [vmem:[#allocation7 + $0x8] sm:$0xff]
    %v437 = vld [vmem:[#allocation7 + $0x10] sm:$0xff]
    %v438 = vld [vmem:[#allocation7 + $0x18] sm:$0xff]
    %v439 = vld [vmem:[#allocation7 + $0x20] sm:$0xff]
    %v440 = vld [vmem:[#allocation7 + $0x28] sm:$0xff]
    %v441 = vld [vmem:[#allocation7 + $0x30] sm:$0xff]
    %v442 = vld [vmem:[#allocation7 + $0x38] sm:$0xff]
    %v443 = vld [vmem:[#allocation7 + $0x40] sm:$0xff]
    %v444 = vld [vmem:[#allocation7 + $0x48] sm:$0xff]
    %v445 = vld [vmem:[#allocation7 + $0x50] sm:$0xff]
    %v446 = vld [vmem:[#allocation7 + $0x58] sm:$0xff]
    %v447 = vld [vmem:[#allocation7 + $0x60] sm:$0xff]
    %v448 = vld [vmem:[#allocation7 + $0x68] sm:$0xff]
    %v449 = vld [vmem:[#allocation7 + $0x70] sm:$0xff]
    %v450 = vld [vmem:[#allocation7 + $0x78] sm:$0xff]
    %v451 = vld [vmem:[#allocation7 + $0x80] sm:$0xff]
    %v452 = vld [vmem:[#allocation7 + $0x88] sm:$0xff]
    %v453 = vld [vmem:[#allocation7 + $0x90] sm:$0xff]
    %v454 = vld [vmem:[#allocation7 + $0x98] sm:$0xff]
    %v455 = vld [vmem:[#allocation7 + $0xa0] sm:$0xff]
    %v456 = vld [vmem:[#allocation7 + $0xa8] sm:$0xff]
    %v457 = vld [vmem:[#allocation7 + $0xb0] sm:$0xff]
    %v458 = vld [vmem:[#allocation7 + $0xb8] sm:$0xff]
    %v459 = vld [vmem:[#allocation7 + $0xc0] sm:$0xff]
    %v460 = vld [vmem:[#allocation7 + $0xc8] sm:$0xff]
    %v461 = vld [vmem:[#allocation7 + $0xd0] sm:$0xff]
    %v462 = vld [vmem:[#allocation7 + $0xd8] sm:$0xff]
    %v463 = vld [vmem:[#allocation7 + $0xe0] sm:$0xff]
    %v464 = vld [vmem:[#allocation7 + $0xe8] sm:$0xff]
    %v465 = vld [vmem:[#allocation7 + $0xf0] sm:$0xff]
    %v466 = vld [vmem:[#allocation7 + $0xf8] sm:$0xff]
    %v467 = vld [vmem:[%s4] sm:$0xf]
    %v469 = vlaneseq
    %v470 = vshrl.u32 %v469, 7
    %v471 = vsub.s32 0, %v470
    %v472 = vrot.slane %v467, %v471
    %v473 = vlaneseq
    %v474 = vshrl.u32 %v473, 7
    %v475 = vsub.s32 1, %v474
    %v476 = vrot.slane %v467, %v475
    %v477 = vlaneseq
    %v478 = vshrl.u32 %v477, 7
    %v479 = vsub.s32 2, %v478
    %v480 = vrot.slane %v467, %v479
    %v481 = vlaneseq
    %v482 = vshrl.u32 %v481, 7
    %v483 = vsub.s32 3, %v482
    %v484 = vrot.slane %v467, %v483
    %v521 = vunpack.c.l.b16 %v435
    %v522 = vunpack.c.h.b16 %v435
    %v523 = vunpack.c.l.b16 %v436
    %v524 = vunpack.c.h.b16 %v436
    %v525 = vunpack.c.l.b16 %v437
    %v526 = vunpack.c.h.b16 %v437
    %v527 = vunpack.c.l.b16 %v438
    %v528 = vunpack.c.h.b16 %v438
    %v529 = vunpack.c.l.b16 %v439
    %v530 = vunpack.c.h.b16 %v439
    %v531 = vunpack.c.l.b16 %v440
    %v532 = vunpack.c.h.b16 %v440
    %v533 = vunpack.c.l.b16 %v441
    %v534 = vunpack.c.h.b16 %v441
    %v535 = vunpack.c.l.b16 %v442
    %v536 = vunpack.c.h.b16 %v442
    %v537 = vunpack.c.l.b16 %v443
    %v538 = vunpack.c.h.b16 %v443
    %v539 = vunpack.c.l.b16 %v444
    %v540 = vunpack.c.h.b16 %v444
    %v541 = vunpack.c.l.b16 %v445
    %v542 = vunpack.c.h.b16 %v445
    %v543 = vunpack.c.l.b16 %v446
    %v544 = vunpack.c.h.b16 %v446
    %v545 = vunpack.c.l.b16 %v447
    %v546 = vunpack.c.h.b16 %v447
    %v547 = vunpack.c.l.b16 %v448
    %v548 = vunpack.c.h.b16 %v448
    %v549 = vunpack.c.l.b16 %v449
    %v550 = vunpack.c.h.b16 %v449
    %v551 = vunpack.c.l.b16 %v450
    %v552 = vunpack.c.h.b16 %v450
    %v553 = vunpack.c.l.b16 %v451
    %v554 = vunpack.c.h.b16 %v451
    %v555 = vunpack.c.l.b16 %v452
    %v556 = vunpack.c.h.b16 %v452
    %v557 = vunpack.c.l.b16 %v453
    %v558 = vunpack.c.h.b16 %v453
    %v559 = vunpack.c.l.b16 %v454
    %v560 = vunpack.c.h.b16 %v454
    %v561 = vunpack.c.l.b16 %v455
    %v562 = vunpack.c.h.b16 %v455
    %v563 = vunpack.c.l.b16 %v456
    %v564 = vunpack.c.h.b16 %v456
    %v565 = vunpack.c.l.b16 %v457
    %v566 = vunpack.c.h.b16 %v457
    %v567 = vunpack.c.l.b16 %v458
    %v568 = vunpack.c.h.b16 %v458
    %v569 = vunpack.c.l.b16 %v459
    %v570 = vunpack.c.h.b16 %v459
    %v571 = vunpack.c.l.b16 %v460
    %v572 = vunpack.c.h.b16 %v460
    %v573 = vunpack.c.l.b16 %v461
    %v574 = vunpack.c.h.b16 %v461
    %v575 = vunpack.c.l.b16 %v462
    %v576 = vunpack.c.h.b16 %v462
    %v577 = vunpack.c.l.b16 %v463
    %v578 = vunpack.c.h.b16 %v463
    %v579 = vunpack.c.l.b16 %v464
    %v580 = vunpack.c.h.b16 %v464
    %v581 = vunpack.c.l.b16 %v465
    %v582 = vunpack.c.h.b16 %v465
    %v583 = vunpack.c.l.b16 %v466
    %v584 = vunpack.c.h.b16 %v466
    %v585 = vpack.c.b16 %v525, %v521
    %v586 = vpack.c.b16 %v526, %v522
    %v587 = vpack.c.b16 %v527, %v523
    %v588 = vpack.c.b16 %v528, %v524
    %v589 = vpack.c.b16 %v533, %v529
    %v590 = vpack.c.b16 %v534, %v530
    %v591 = vpack.c.b16 %v535, %v531
    %v592 = vpack.c.b16 %v536, %v532
    %v593 = vpack.c.b16 %v541, %v537
    %v594 = vpack.c.b16 %v542, %v538
    %v595 = vpack.c.b16 %v543, %v539
    %v596 = vpack.c.b16 %v544, %v540
    %v597 = vpack.c.b16 %v549, %v545
    %v598 = vpack.c.b16 %v550, %v546
    %v599 = vpack.c.b16 %v551, %v547
    %v600 = vpack.c.b16 %v552, %v548
    %v601 = vpack.c.b16 %v557, %v553
    %v602 = vpack.c.b16 %v558, %v554
    %v603 = vpack.c.b16 %v559, %v555
    %v604 = vpack.c.b16 %v560, %v556
    %v605 = vpack.c.b16 %v565, %v561
    %v606 = vpack.c.b16 %v566, %v562
    %v607 = vpack.c.b16 %v567, %v563
    %v608 = vpack.c.b16 %v568, %v564
    %v609 = vpack.c.b16 %v573, %v569
    %v610 = vpack.c.b16 %v574, %v570
    %v611 = vpack.c.b16 %v575, %v571
    %v612 = vpack.c.b16 %v576, %v572
    %v613 = vpack.c.b16 %v581, %v577
    %v614 = vpack.c.b16 %v582, %v578
    %v615 = vpack.c.b16 %v583, %v579
    %v616 = vpack.c.b16 %v584, %v580
    %649 = vmatprep.subr.bf16.mxu0 %v586
    %650 = vmatpush1.bf16.msra.mxu0 %v585
    %651 = vmatprep.subr.bf16.mxu0 %v590
    %652 = vmatpush1.bf16.msra.mxu0 %v589
    %653 = vmatprep.subr.bf16.mxu0 %v594
    %654 = vmatpush1.bf16.msra.mxu0 %v593
    %655 = vmatprep.subr.bf16.mxu0 %v598
    %656 = vmatpush1.bf16.msra.mxu0 %v597
    %657 = vmatprep.subr.bf16.mxu0 %v602
    %658 = vmatpush1.bf16.msra.mxu0 %v601
    %659 = vmatprep.subr.bf16.mxu0 %v606
    %660 = vmatpush1.bf16.msra.mxu0 %v605
    %661 = vmatprep.subr.bf16.mxu0 %v610
    %662 = vmatpush1.bf16.msra.mxu0 %v609
    %663 = vmatprep.subr.bf16.mxu0 %v614
    %664 = vmatpush1.bf16.msra.mxu0 %v613
    %665 = vmatprep.subr.bf16.mxu0 0
    %666 = vmatpush1.bf16.msra.mxu0 0
    %667 = vmatprep.subr.bf16.mxu0 0
    %668 = vmatpush1.bf16.msra.mxu0 0
    %669 = vmatprep.subr.bf16.mxu0 0
    %670 = vmatpush1.bf16.msra.mxu0 0
    %671 = vmatprep.subr.bf16.mxu0 0
    %672 = vmatpush1.bf16.msra.mxu0 0
    %673 = vmatprep.subr.bf16.mxu0 0
    %674 = vmatpush1.bf16.msra.mxu0 0
    %675 = vmatprep.subr.bf16.mxu0 0
    %676 = vmatpush1.bf16.msra.mxu0 0
    %677 = vmatprep.subr.bf16.mxu0 0
    %678 = vmatpush1.bf16.msra.mxu0 0
    %679 = vmatprep.subr.bf16.mxu0 0
    %680 = vmatpush1.bf16.msra.mxu0 0
    %681 = vmatprep.mubr.bf16.mxu0 0
    %682 = vmatmul.mubr.bf16.gmra.mrb[0].mxu0 %v434
    %v683 = vpop.f32.mrb[0].mxu0
    %v684 = vadd.f32 %v472, %v683
    %v685 = vpop.f32.mrb[0].mxu0
    %v686 = vadd.f32 %v476, %v685
    %v687 = vpop.f32.mrb[0].mxu0
    %v688 = vadd.f32 %v472, %v687
    %v689 = vpop.f32.mrb[0].mxu0
    %v690 = vadd.f32 %v476, %v689
    %691 = vdwg.mxu0
    %692 = vmatprep.subr.bf16.mxu0 %v588
    %693 = vmatpush1.bf16.msra.mxu0 %v587
    %694 = vmatprep.subr.bf16.mxu0 %v592
    %695 = vmatpush1.bf16.msra.mxu0 %v591
    %696 = vmatprep.subr.bf16.mxu0 %v596
    %697 = vmatpush1.bf16.msra.mxu0 %v595
    %698 = vmatprep.subr.bf16.mxu0 %v600
    %699 = vmatpush1.bf16.msra.mxu0 %v599
    %700 = vmatprep.subr.bf16.mxu0 %v604
    %701 = vmatpush1.bf16.msra.mxu0 %v603
    %702 = vmatprep.subr.bf16.mxu0 %v608
    %703 = vmatpush1.bf16.msra.mxu0 %v607
    %704 = vmatprep.subr.bf16.mxu0 %v612
    %705 = vmatpush1.bf16.msra.mxu0 %v611
    %706 = vmatprep.subr.bf16.mxu0 %v616
    %707 = vmatpush1.bf16.msra.mxu0 %v615
    %708 = vmatprep.subr.bf16.mxu0 0
    %709 = vmatpush1.bf16.msra.mxu0 0
    %710 = vmatprep.subr.bf16.mxu0 0
    %711 = vmatpush1.bf16.msra.mxu0 0
    %712 = vmatprep.subr.bf16.mxu0 0
    %713 = vmatpush1.bf16.msra.mxu0 0
    %714 = vmatprep.subr.bf16.mxu0 0
    %715 = vmatpush1.bf16.msra.mxu0 0
    %716 = vmatprep.subr.bf16.mxu0 0
    %717 = vmatpush1.bf16.msra.mxu0 0
    %718 = vmatprep.subr.bf16.mxu0 0
    %719 = vmatpush1.bf16.msra.mxu0 0
    %720 = vmatprep.subr.bf16.mxu0 0
    %721 = vmatpush1.bf16.msra.mxu0 0
    %722 = vmatprep.subr.bf16.mxu0 0
    %723 = vmatpush1.bf16.msra.mxu0 0
    %724 = vmatprep.mubr.bf16.mxu0 0
    %725 = vmatmul.mubr.bf16.gmra.mrb[0].mxu0 %v434
    %v726 = vpop.f32.mrb[0].mxu0
    %v727 = vadd.f32 %v480, %v726
    %v728 = vpop.f32.mrb[0].mxu0
    %v729 = vadd.f32 %v484, %v728
    %v730 = vpop.f32.mrb[0].mxu0
    %v731 = vadd.f32 %v480, %v730
    %v732 = vpop.f32.mrb[0].mxu0
    %v733 = vadd.f32 %v484, %v732
    %734 = vdwg.mxu0
    %735 = vst [vmem:[#allocation8] sm:$0xff] %v684
    %736 = vst [vmem:[#allocation8 + $0x8] sm:$0xff] %v686
    %737 = vst [vmem:[#allocation8 + $0x10] sm:$0xff] %v727
    %738 = vst [vmem:[#allocation8 + $0x18] sm:$0xff] %v729
    %739 = vst [vmem:[#allocation8 + $0x20] sm:$0xff] %v688
    %740 = vst [vmem:[#allocation8 + $0x28] sm:$0xff] %v690
    %741 = vst [vmem:[#allocation8 + $0x30] sm:$0xff] %v731
    %742 = vst [vmem:[#allocation8 + $0x38] sm:$0xff] %v733
    // Predicated region
    $region34: #{tpu_custom_call.1} parent=1 // pred_check
      _
    $region35: #{tpu_custom_call.1} parent=1 // pred_check_branch
      %744 = sbr.rel (0) target = $region37
    $region36: #{tpu_custom_call.1} parent=1 // pred_region
      %s746 = ssub.s32 1024, 1024
      %747 = vsyncadd [#allocation4], %s746
      %s748 = sshll.u32 [#allocation8], 4
      %s749 = int_to_ptr.vmem [resolvable:$true] %s748
      %754 = dma.vmem_to_hbm [thread:$0]  %s749, 1024, %s5, [#allocation4], 512, 512, 32
    $region37: #{tpu_custom_call.1} parent=1 // pred_fallthru
      _
    // Predicated region
    $region38: #{tpu_custom_call.1} parent=1 // pred_check
      _
    $region39: #{tpu_custom_call.1} parent=1 // pred_check_branch
      %756 = sbr.rel (0) target = $region41
    $region40: #{tpu_custom_call.1} parent=1 // pred_region
      %757 = dma.done [#allocation4], 1024
    $region41: #{tpu_custom_call.1} parent=1 // pred_fallthru
      _
    %758 = vsyncpa [#allocation3], 1
    %759 = vsyncpa [#allocation6], 1
    %760 = vsyncpa [#allocation4], 1

</llo_original>
